<compile_context>
chip_gen: v5e
topology: v5e:2x2
jax: 0.10.0
libtpu: 0.0.40
codegen_flags: <defaults>
</compile_context>

<pallas_src>
import jax
import jax.numpy as jnp
from jax.experimental import pallas as pl
from jax.experimental.pallas import tpu as pltpu


# ----------------------------------------------------------------------------- helpers
def _round_up(x, m):
    return (x + m - 1) // m * m


_VMEM_LIMIT_BYTES = 32 * 1024 * 1024  # safe on v5e/v6e (128 MiB) and v7x (64 MiB)


# ----------------------------------------------------------------------------- kernels
def _row_linear_kernel(x_ref, w_ref, b_ref, o_ref):
    """One row-tile of   x @ w + b   (MXU matmul, f32 accumulate)."""
    acc = jnp.dot(x_ref[...], w_ref[...], preferred_element_type=jnp.float32)
    o_ref[...] = (acc + b_ref[...]).astype(o_ref.dtype)


def _edge_score_kernel(pg_ref, pd_ref, w2_ref, b2_ref, o_ref):
    """One edge-tile of   relu(P_g[row] + P_d[col]) . w2 + b2.

    pg_ref/pd_ref : (TE, H) gathered projection rows (VMEM, double-buffered)
    w2_ref        : (1, H)  VMEM-resident weight row
    b2_ref        : (1, 1)  SMEM scalar
    o_ref         : (TE, 1)
    """
    h = jnp.maximum(pg_ref[...] + pd_ref[...], 0.0)            # VPU add + relu
    # Second linear as multiply + lane reduction: keeps the N=1 matmul off the MXU.
    s = jnp.sum(h * w2_ref[...], axis=-1, keepdims=True)       # VPU mul + XLU reduce
    o_ref[...] = (s + b2_ref[0, 0]).astype(o_ref.dtype)


# ----------------------------------------------------------------------------- wrappers
def node_projection_pallas(x, w, b, *, max_rows_per_tile=256):
    """x: (N, H_in), w: (H_in, H_out), b: (1, H_out) -> (N, H_out) = x @ w + b."""
    N, H_in = x.shape
    H_out = w.shape[1]

    tn = max(8, min(_round_up(max_rows_per_tile, 8), _round_up(N, 8)))
    n_pad = _round_up(N, tn)
    if n_pad != N:
        x = jnp.pad(x, ((0, n_pad - N), (0, 0)))

    out = pl.pallas_call(
        _row_linear_kernel,
        out_shape=jax.ShapeDtypeStruct((n_pad, H_out), jnp.float32),
        grid=(n_pad // tn,),
        in_specs=[
            pl.BlockSpec((tn, H_in), lambda i: (i, 0)),       # row tile of x
            pl.BlockSpec((H_in, H_out), lambda i: (0, 0)),    # weights resident
            pl.BlockSpec((1, H_out), lambda i: (0, 0)),       # bias resident
        ],
        out_specs=pl.BlockSpec((tn, H_out), lambda i: (i, 0)),
        compiler_params=pltpu.CompilerParams(
            dimension_semantics=("parallel",),
            vmem_limit_bytes=_VMEM_LIMIT_BYTES,
        ),
    )(x, w, b.reshape(1, H_out))
    return out[:N]


def _edge_tile_rows(E, H, itemsize, target_rows, input_budget_bytes=16 * 1024 * 1024):
    """Largest multiple-of-8 tile within the VMEM budget (2 inputs x 2 buffers)."""
    per_row = 2 * 2 * H * itemsize
    cap = max(8, (input_budget_bytes // per_row) // 8 * 8)
    te = min(_round_up(target_rows, 8), cap, _round_up(E, 8))
    return max(8, (te // 8) * 8)


def edge_score_pallas(pg_rows, pd_cols, w2, b2, *, max_rows_per_tile=1024):
    """pg_rows/pd_cols: (E, H). Returns (E,) = relu(pg+pd) @ w2 + b2."""
    E, H = pg_rows.shape
    te = _edge_tile_rows(E, H, pg_rows.dtype.itemsize, max_rows_per_tile)
    e_pad = _round_up(E, te)
    if e_pad != E:
        pad = e_pad - E
        pg_rows = jnp.pad(pg_rows, ((0, pad), (0, 0)))
        pd_cols = jnp.pad(pd_cols, ((0, pad), (0, 0)))

    w2_row = w2.reshape(1, H)
    b2_s = b2.reshape(1, 1)

    out = pl.pallas_call(
        _edge_score_kernel,
        out_shape=jax.ShapeDtypeStruct((e_pad, 1), jnp.float32),
        grid=(e_pad // te,),
        in_specs=[
            pl.BlockSpec((te, H), lambda i: (i, 0)),                  # P_g[row] tile
            pl.BlockSpec((te, H), lambda i: (i, 0)),                  # P_d[col] tile
            pl.BlockSpec((1, H), lambda i: (0, 0)),                   # w2 resident
            pl.BlockSpec(memory_space=pltpu.MemorySpace.SMEM),        # b2 scalar
        ],
        out_specs=pl.BlockSpec((te, 1), lambda i: (i, 0)),
        compiler_params=pltpu.CompilerParams(
            dimension_semantics=("parallel",),                        # 2 TCs on v7x
            vmem_limit_bytes=_VMEM_LIMIT_BYTES,
        ),
    )(pg_rows, pd_cols, w2_row, b2_s)
    return out[:E, 0]


def edge_decoder_forward(z_gene, z_disease, edge_label_index, params,
                         *, max_edge_tile_rows=1024, max_node_tile_rows=256):
    """Mirrors EdgeDecoder.forward semantics."""
    H = params["w1"].shape[1]
    w1_g = params["w1"][:H, :]          # gene half of lin1 (in, out) layout
    w1_d = params["w1"][H:, :]          # disease half
    b1 = params["b1"].reshape(1, H)
    zero_b = jnp.zeros((1, H), params["b1"].dtype)

    # Per-node projections (small dense matmuls, done once per node table).
    p_g = node_projection_pallas(z_gene, w1_g, b1, max_rows_per_tile=max_node_tile_rows)
    p_d = node_projection_pallas(z_disease, w1_d, zero_b, max_rows_per_tile=max_node_tile_rows)

    row, col = edge_label_index[0], edge_label_index[1]
    # TODO(synk): the row/col gather is still XLA glue (one (E, H) round trip per
    # side); an in-kernel gather from VMEM-resident P tables via scalar-prefetched
    # indices would remove it but is omitted here for lowering robustness.
    pg_rows = p_g[row]
    pd_cols = p_d[col]

    return edge_score_pallas(pg_rows, pd_cols, params["w2"], params["b2"],
                             max_rows_per_tile=max_edge_tile_rows)


def init_params(key, hidden_channels):
    """Deterministic synthetic init. Weight layout is (in, out) == PyTorch W.T."""
    k1, k2, k3, k4 = jax.random.split(key, 4)
    in1 = 2 * hidden_channels
    w1 = jax.random.normal(k1, (in1, hidden_channels), jnp.float32) * (1.0 / jnp.sqrt(in1))
    b1 = jax.random.normal(k2, (1, hidden_channels), jnp.float32) * 0.01
    w2 = jax.random.normal(k3, (hidden_channels, 1), jnp.float32) * (1.0 / jnp.sqrt(hidden_channels))
    b2 = jax.random.normal(k4, (1, 1), jnp.float32) * 0.01
    return {"w1": w1, "b1": b1, "w2": w2, "b2": b2}


if __name__ == "__main__":
    key = jax.random.PRNGKey(0)
    hidden = 32
    n_gene, n_disease, n_edges = 40, 24, 200

    kg, kd, ke, kp = jax.random.split(key, 4)
    z_gene = jax.random.normal(kg, (n_gene, hidden), jnp.float32)
    z_disease = jax.random.normal(kd, (n_disease, hidden), jnp.float32)
    edge_label_index = jnp.stack(
        [
            jax.random.randint(ke, (n_edges,), 0, n_gene, dtype=jnp.int32),
            jax.random.randint(jax.random.fold_in(ke, 1), (n_edges,), 0, n_disease,
                               dtype=jnp.int32),
        ],
        axis=0,
    )
    params = init_params(kp, hidden)

    # Small tile overrides so the demo exercises multi-tile grids + tail padding.
    out = edge_decoder_forward(z_gene, z_disease, edge_label_index, params,
                               max_edge_tile_rows=64, max_node_tile_rows=16)
    out = jax.block_until_ready(out)

    # Plain-JAX reference (matches the PyTorch forward).
    row, col = edge_label_index[0], edge_label_index[1]
    z_cat = jnp.concatenate([z_gene[row], z_disease[col]], axis=-1)
    ref = (jnp.maximum(z_cat @ params["w1"] + params["b1"], 0.0)
           @ params["w2"] + params["b2"]).reshape(-1)

    assert out.shape == (n_edges,)
    assert jnp.allclose(out, ref, atol=1e-4, rtol=1e-4), float(jnp.max(jnp.abs(out - ref)))

    print("KERNEL_OK")
</pallas_src>

<mosaic_0001>
module attributes {stable_mosaic.version = 11 : i64} {
  func.func @_row_linear_kernel(%arg0: i32, %arg1: memref<16x32xf32, #tpu.memory_space<vmem>>, %arg2: memref<32x32xf32, #tpu.memory_space<vmem>>, %arg3: memref<1x32xf32, #tpu.memory_space<vmem>>, %arg4: memref<16x32xf32, #tpu.memory_space<vmem>>) attributes {dimension_semantics = [#tpu.dimension_semantics<parallel>], iteration_bounds = array<i64: 3>, scalar_prefetch = 0 : i64, scratch_operands = 0 : i64, tpu.core_type = #tpu.core_type<tc>, window_params = [{transform_indices = @transform_0, window_bounds = array<i64: 16, 32>}, {pipeline_mode = #tpu.pipeline_mode<synchronous>, transform_indices = @transform_1, window_bounds = array<i64: 32, 32>}, {pipeline_mode = #tpu.pipeline_mode<synchronous>, transform_indices = @transform_2, window_bounds = array<i64: 1, 32>}, {transform_indices = @transform_3, window_bounds = array<i64: 16, 32>}]} {
    %c0 = arith.constant 0 : index
    %c0_0 = arith.constant 0 : index
    %0 = vector.load %arg1[%c0, %c0_0] : memref<16x32xf32, #tpu.memory_space<vmem>>, vector<16x32xf32>
    %c0_1 = arith.constant 0 : index
    %c0_2 = arith.constant 0 : index
    %1 = vector.load %arg2[%c0_1, %c0_2] : memref<32x32xf32, #tpu.memory_space<vmem>>, vector<32x32xf32>
    %cst = arith.constant dense<0.000000e+00> : vector<16x32xf32>
    %2 = tpu.matmul %0, %1, %cst {dimension_numbers = #tpu.dot_dimension_numbers<[1], [0], [0], [1], [0, 0, 1, 1], [], []>} : vector<16x32xf32>, vector<32x32xf32>, vector<16x32xf32> -> vector<16x32xf32>
    %c0_3 = arith.constant 0 : index
    %c0_4 = arith.constant 0 : index
    %3 = vector.load %arg3[%c0_3, %c0_4] : memref<1x32xf32, #tpu.memory_space<vmem>>, vector<1x32xf32>
    %4 = vector.broadcast %3 : vector<1x32xf32> to vector<16x32xf32>
    %5 = arith.addf %2, %4 : vector<16x32xf32>
    %c0_5 = arith.constant 0 : index
    %c0_6 = arith.constant 0 : index
    %6 = vector.load %arg4[%c0_5, %c0_6] : memref<16x32xf32, #tpu.memory_space<vmem>>, vector<16x32xf32>
    tpu.vector_store %arg4[%c0_5, %c0_6], %5 {strides = array<i32>} : memref<16x32xf32, #tpu.memory_space<vmem>>, vector<16x32xf32>,
    return
  }
  func.func @transform_0(%arg0: i32) -> (i32, i32) {
    %c0_i32 = arith.constant 0 : i32
    %c0_i32_0 = arith.constant 0 : i32
    return %arg0, %c0_i32 : i32, i32
  }
  func.func @transform_1(%arg0: i32) -> (i32, i32) {
    %c0_i32 = arith.constant 0 : i32
    %c0_i32_0 = arith.constant 0 : i32
    %c0_i32_1 = arith.constant 0 : i32
    return %c0_i32, %c0_i32_0 : i32, i32
  }
  func.func @transform_2(%arg0: i32) -> (i32, i32) {
    %c0_i32 = arith.constant 0 : i32
    %c0_i32_0 = arith.constant 0 : i32
    %c0_i32_1 = arith.constant 0 : i32
    return %c0_i32, %c0_i32_0 : i32, i32
  }
  func.func @transform_3(%arg0: i32) -> (i32, i32) {
    %c0_i32 = arith.constant 0 : i32
    %c0_i32_0 = arith.constant 0 : i32
    return %arg0, %c0_i32 : i32, i32
  }
}

</mosaic_0001>

<llo_original>
// kernel: tpu_custom_call.1
$region0: #{tpu_custom_call.1}
  #allocation0 [shape = 'u32[]', space=smem, size = 0x4, offset = 0x4, fixed_abs, tag = 'smem constant byte address 0x4 - core index']
  #allocation1 [shape = 'u32[72,128]{1,0:T(1,128)}', space=vmem, size = 0x9000, scoped, tag = 'internal scratch']
  %s0 = inlined_call_operand.vmem [shape: f32[48,32], index: 0, kind: input, shape index: {}]
  %s1 = inlined_call_operand.vmem [shape: f32[32,32], index: 1, kind: input, shape index: {}]
  %s2 = inlined_call_operand.vmem [shape: f32[1,32], index: 2, kind: input, shape index: {}]
  %s3 = inlined_call_operand.vmem [shape: f32[48,32], index: 3, kind: output, shape index: {}]
  %s4 = sld [smem:[#allocation0]]
  $region45: #{tpu_custom_call.1} parent=0
    _
  %s6 = ssub.s32 1, %s4
  %s7 = scalar_select 0, %s6, %s4
  loop: start=0, step=1, limit=5
  $region2: #{tpu_custom_call.1} parent=0 // loop_pre_header
    _
  $region3: #{tpu_custom_call.1} parent=0 // loop_header
    %s9 = sphi 0, %s13
    %p10 = scmp.ge.s32.totalorder %s9, 5
    %s19 = sphi 0, %s21
    %s22 = sphi 0, %s19
    %s23 = sphi 0, %s22
    %s39 = sphi 0, %s23
    %s43 = sphi 0, %s43
    %s45 = sphi 0, %s43
    %s46 = sphi 0, %s45
    %s60 = sphi 0, %s46
    %s64 = sphi 0, %s64
    %s66 = sphi 0, %s64
    %s67 = sphi 0, %s66
    %s81 = sphi 0, %s67
    %s87 = sphi 0, %s89
    %s90 = sphi 0, %s87
    %s91 = sphi 0, %s90
    %s107 = sphi 0, %s91
  $region4: #{tpu_custom_call.1} parent=0 // loop_header_branch
    %12 = sbr.rel (%p10) target = $region8
  $region5: #{tpu_custom_call.1} parent=0 // loop_body
    %s14 = ssub.s32 %s9, 1
    %s15 = ssub.s32 %s9, 2
    %s16 = sadd.s32 %s9, 1
    %s17 = ssub.s32 %s9, %s16
    %p18 = scmp.eq.s32.totalorder %s17, 0
    %s20 = sadd.s32 %s19, 1
    %s21 = scalar_select %p18, %s19, %s20
    %p24 = pneg %p18
    %p25 = scmp.eq.s32.totalorder %s9, 2
    %p26 = por %p24, %p25
    %p27 = scmp.ne.s32.totalorder %s19, %s22
    %p28 = scmp.eq.s32.totalorder %s9, 0
    %p29 = por %p27, %p28
    %p30 = scmp.ne.s32.totalorder %s19, %s22
    %p31 = scmp.eq.s32.totalorder %s14, 2
    %p32 = por %p30, %p31
    %p33 = scmp.ne.s32.totalorder %s22, %s23
    %p34 = scmp.eq.s32.totalorder %s14, 0
    %p35 = por %p33, %p34
    %p36 = scmp.ne.s32.totalorder %s22, %s23
    %p37 = scmp.eq.s32.totalorder %s15, 2
    %p38 = por %p36, %p37
    %p40 = scmp.ne.s32.totalorder %s23, %s39
    %p41 = scmp.eq.s32.totalorder %s15, 0
    %p42 = por %p40, %p41
    %s44 = sadd.s32 %s43, 1
    %p47 = scmp.eq.s32.totalorder %s9, 2
    %p48 = scmp.ne.s32.totalorder %s43, %s45
    %p49 = scmp.eq.s32.totalorder %s9, 0
    %p50 = por %p48, %p49
    %p51 = scmp.ne.s32.totalorder %s43, %s45
    %p52 = scmp.eq.s32.totalorder %s14, 2
    %p53 = por %p51, %p52
    %p54 = scmp.ne.s32.totalorder %s45, %s46
    %p55 = scmp.eq.s32.totalorder %s14, 0
    %p56 = por %p54, %p55
    %p57 = scmp.ne.s32.totalorder %s45, %s46
    %p58 = scmp.eq.s32.totalorder %s15, 2
    %p59 = por %p57, %p58
    %p61 = scmp.ne.s32.totalorder %s46, %s60
    %p62 = scmp.eq.s32.totalorder %s15, 0
    %p63 = por %p61, %p62
    %s65 = sadd.s32 %s64, 1
    %p68 = scmp.eq.s32.totalorder %s9, 2
    %p69 = scmp.ne.s32.totalorder %s64, %s66
    %p70 = scmp.eq.s32.totalorder %s9, 0
    %p71 = por %p69, %p70
    %p72 = scmp.ne.s32.totalorder %s64, %s66
    %p73 = scmp.eq.s32.totalorder %s14, 2
    %p74 = por %p72, %p73
    %p75 = scmp.ne.s32.totalorder %s66, %s67
    %p76 = scmp.eq.s32.totalorder %s14, 0
    %p77 = por %p75, %p76
    %p78 = scmp.ne.s32.totalorder %s66, %s67
    %p79 = scmp.eq.s32.totalorder %s15, 2
    %p80 = por %p78, %p79
    %p82 = scmp.ne.s32.totalorder %s67, %s81
    %p83 = scmp.eq.s32.totalorder %s15, 0
    %p84 = por %p82, %p83
    %s85 = ssub.s32 %s9, %s16
    %p86 = scmp.eq.s32.totalorder %s85, 0
    %s88 = sadd.s32 %s87, 1
    %s89 = scalar_select %p86, %s87, %s88
    %p92 = pneg %p86
    %p93 = scmp.eq.s32.totalorder %s9, 2
    %p94 = por %p92, %p93
    %p95 = scmp.ne.s32.totalorder %s87, %s90
    %p96 = scmp.eq.s32.totalorder %s9, 0
    %p97 = por %p95, %p96
    %p98 = scmp.ne.s32.totalorder %s87, %s90
    %p99 = scmp.eq.s32.totalorder %s14, 2
    %p100 = por %p98, %p99
    %p101 = scmp.ne.s32.totalorder %s90, %s91
    %p102 = scmp.eq.s32.totalorder %s14, 0
    %p103 = por %p101, %p102
    %p104 = scmp.ne.s32.totalorder %s90, %s91
    %p105 = scmp.eq.s32.totalorder %s15, 2
    %p106 = por %p104, %p105
    %p108 = scmp.ne.s32.totalorder %s91, %s107
    %p109 = scmp.eq.s32.totalorder %s15, 0
    %p110 = por %p108, %p109
    %p111 = scmp.le.s32.totalorder 1, %s9
    %p112 = scmp.lt.s32.totalorder %s9, 4
    %p113 = pnand %p111, %p112
    %p114 = pneg %p113
    // Predicated region
    $region9: #{tpu_custom_call.1} parent=5 // pred_check
      _
    $region10: #{tpu_custom_call.1} parent=5 // pred_check_branch
      %116 = sbr.rel (%p113) target = $region12
    $region11: #{tpu_custom_call.1} parent=5 // pred_region
      %s117 = ssub.s32 %s9, 1
      // Predicated region
      $region13: #{tpu_custom_call.1} parent=11 // pred_check
        %p118 = pneg %p56
      $region14: #{tpu_custom_call.1} parent=11 // pred_check_branch
        %120 = sbr.rel (%p118) target = $region16
      $region15: #{tpu_custom_call.1} parent=11 // pred_region
        _
      $region16: #{tpu_custom_call.1} parent=11 // pred_fallthru
        _
      // Predicated region
      $region17: #{tpu_custom_call.1} parent=11 // pred_check
        %p121 = pneg %p77
      $region18: #{tpu_custom_call.1} parent=11 // pred_check_branch
        %123 = sbr.rel (%p121) target = $region20
      $region19: #{tpu_custom_call.1} parent=11 // pred_region
        _
      $region20: #{tpu_custom_call.1} parent=11 // pred_fallthru
        _
    $region12: #{tpu_custom_call.1} parent=5 // pred_fallthru
      _
    %p124 = scmp.lt.s32.totalorder %s9, 3
    // Predicated region
    $region21: #{tpu_custom_call.1} parent=5 // pred_check
      %p125 = pneg %p124
    $region22: #{tpu_custom_call.1} parent=5 // pred_check_branch
      %127 = sbr.rel (%p125) target = $region24
    $region23: #{tpu_custom_call.1} parent=5 // pred_region
      // Predicated region
      $region25: #{tpu_custom_call.1} parent=23 // pred_check
        %p128 = pneg %p29
      $region26: #{tpu_custom_call.1} parent=23 // pred_check_branch
        %130 = sbr.rel (%p128) target = $region28
      $region27: #{tpu_custom_call.1} parent=23 // pred_region
        %s131 = smul.u32 2, %s9
        %p132 = scmp.lt.s32.totalorder %s131, 5
        %s133 = scalar_select %p132, %s131, 5
        %s134 = smul.addr %s133, 8
        %s135 = scalar_lea.vmem %s0, %s134
        %s136 = smul.u32 2, %s9
      $region28: #{tpu_custom_call.1} parent=23 // pred_fallthru
        _
    $region24: #{tpu_custom_call.1} parent=5 // pred_fallthru
      _
    %p137 = scmp.le.s32.totalorder 1, %s9
    %p138 = scmp.lt.s32.totalorder %s9, 4
    %p139 = pnand %p137, %p138
    %p140 = pneg %p139
    // Predicated region
    $region29: #{tpu_custom_call.1} parent=5 // pred_check
      _
    $region30: #{tpu_custom_call.1} parent=5 // pred_check_branch
      %142 = sbr.rel (%p139) target = $region32
    $region31: #{tpu_custom_call.1} parent=5 // pred_region
      %s143 = ssub.s32 %s9, 1
      %s144 = smul.u32 2, %s14
      %p145 = scmp.lt.s32.totalorder %s144, 5
      %s146 = scalar_select %p145, %s144, 5
      %s147 = smul.addr %s146, 8
      %s148 = scalar_lea.vmem %s0, %s147
      %p149 = pneg %p35
      %p150 = pneg %p32
      %p151 = pneg %p56
      %p152 = pneg %p53
      %p153 = pneg %p77
      %p154 = pneg %p74
      %p155 = pneg %p103
      %p156 = pneg %p100
      %s157 = smul.u32 2, %s14
      %p158 = scmp.lt.s32.totalorder %s157, 5
      %s159 = scalar_select %p158, %s157, 5
      %s160 = smul.addr %s159, 8
      %s161 = scalar_lea.vmem %s3, %s160
      %s162 = smul.u32 2, %s14
      %p163 = scmp.lt.s32.totalorder %s162, 5
      %s164 = scalar_select %p163, %s162, 5
      %s165 = smul.addr %s164, 8
      %s166 = scalar_lea.vmem %s0, %s165
      %s167 = smul.u32 2, %s14
      %s168 = smul.u32 2, %s14
      %p169 = scmp.lt.s32.totalorder %s168, 5
      %s170 = scalar_select %p169, %s168, 5
      %s171 = smul.addr %s170, 8
      %s172 = scalar_lea.vmem %s3, %s171
      %s173 = smul.u32 2, %s14
      %v174 = vld [vmem:[%s166] sm:$0xff]
      %v175 = vld [vmem:[%s166 + $0x8] sm:$0xff]
      %v176 = vld [vmem:[%s1] sm:$0xff]
      %v177 = vld [vmem:[%s1 + $0x8] sm:$0xff]
      %v178 = vld [vmem:[%s1 + $0x10] sm:$0xff]
      %v179 = vld [vmem:[%s1 + $0x18] sm:$0xff]
      %v180 = vld [vmem:[%s2] sm:$0x1]
      %v182 = vperm.slane %v180, 0
      %vm184 = vcmask 261120
      %v186 = vsel %vm184, %v174, 0
      %v189 = vsel %vm184, %v175, 0
      %191 = vmatpush.msra.mxu0 0.0
      %192 = vmatpush.msra.mxu0 0.0
      %193 = vmatpush.msra.mxu0 0.0
      %194 = vmatpush.msra.mxu0 0.0
      %195 = vmatpush.msra.mxu0 0.0
      %196 = vmatpush.msra.mxu0 0.0
      %197 = vmatpush.msra.mxu0 0.0
      %198 = vmatpush.msra.mxu0 0.0
      %199 = vmatpush.msra.mxu0 0.0
      %200 = vmatpush.msra.mxu0 0.0
      %201 = vmatpush.msra.mxu0 0.0
      %202 = vmatpush.msra.mxu0 0.0
      %203 = vmatpush.msra.mxu0 %v179
      %204 = vmatpush.msra.mxu0 %v178
      %205 = vmatpush.msra.mxu0 %v177
      %206 = vmatpush.msra.mxu0 %v176
      %207 = vmatmul.f32.gmra.mxu0 %v186
      %v208 = vpop.f32.mrf.mxu0
      %v209 = vadd.f32 %v182, %v208
      %210 = vmatmul.f32.gmra.mxu0 %v189
      %v211 = vpop.f32.mrf.mxu0
      %v212 = vadd.f32 %v182, %v211
      %213 = vdwg.mxu0
      %214 = vst.msk [vmem:[%s172] sm:$0xff] %vm184, %v209
      %215 = vst.msk [vmem:[%s172 + $0x8] sm:$0xff] %vm184, %v212
      %s216 = smul.u32 2, %s14
      %p217 = scmp.lt.s32.totalorder %s216, 5
      %s218 = scalar_select %p217, %s216, 5
      %s219 = smul.addr %s218, 8
      %s220 = scalar_lea.vmem %s3, %s219
      // Predicated region
      $region33: #{tpu_custom_call.1} parent=31 // pred_check
        %p221 = pneg %p100
      $region34: #{tpu_custom_call.1} parent=31 // pred_check_branch
        %223 = sbr.rel (%p221) target = $region36
      $region35: #{tpu_custom_call.1} parent=31 // pred_region
        %s224 = smul.u32 2, %s14
      $region36: #{tpu_custom_call.1} parent=31 // pred_fallthru
        _
    $region32: #{tpu_custom_call.1} parent=5 // pred_fallthru
      _
    %p225 = scmp.le.s32.totalorder 2, %s9
    // Predicated region
    $region37: #{tpu_custom_call.1} parent=5 // pred_check
      %p226 = pneg %p225
    $region38: #{tpu_custom_call.1} parent=5 // pred_check_branch
      %228 = sbr.rel (%p226) target = $region40
    $region39: #{tpu_custom_call.1} parent=5 // pred_region
      %s229 = ssub.s32 %s9, 2
      // Predicated region
      $region41: #{tpu_custom_call.1} parent=39 // pred_check
        %p230 = pneg %p106
      $region42: #{tpu_custom_call.1} parent=39 // pred_check_branch
        %232 = sbr.rel (%p230) target = $region44
      $region43: #{tpu_custom_call.1} parent=39 // pred_region
        %s233 = smul.u32 2, %s15
        %p234 = scmp.lt.s32.totalorder %s233, 5
        %s235 = scalar_select %p234, %s233, 5
        %s236 = smul.addr %s235, 8
        %s237 = scalar_lea.vmem %s3, %s236
      $region44: #{tpu_custom_call.1} parent=39 // pred_fallthru
        _
    $region40: #{tpu_custom_call.1} parent=5 // pred_fallthru
      _
  $region6: #{tpu_custom_call.1} parent=0 // loop_footer
    %s13 = sadd.s32 1, %s9
  $region7: #{tpu_custom_call.1} parent=0 // loop_footer_branch
    %8 = sbr.rel target = $region3
  $region8: #{tpu_custom_call.1} parent=0 // loop_exit
    _

</llo_original>
